<compile_context>
chip_gen: v7x
topology: tpu7x:2x2x1
jax: 0.10.0
libtpu: 0.0.40
codegen_flags: <defaults>
</compile_context>

<pallas_src>
import math

import jax
import jax.numpy as jnp
from jax.experimental import pallas as pl
from jax.experimental.pallas import tpu as pltpu

_LANE = 128            # lane-dense last dim (unmasked full-vreg stores)
_MAX_BLOCK_ROWS = 8192  # (8192, 128) f32 tile = 4 MiB; 2 bufs x (in+out) = 16 MiB VMEM


def _round_up(v, m):
    return -(-v // m) * m


def _choose_block_rows(rows):
    """Largest block that keeps pad waste small; all candidates are multiples of 8."""
    if rows <= _MAX_BLOCK_ROWS:
        return rows
    for br in (8192, 4096, 2048, 1024, 512):
        if _round_up(rows, br) - rows <= rows // 8:
            return br
    return 512


# ---------------------------------------------------------------------------
# Kernels (scalars / series coefficients baked in as trace-time constants)
# ---------------------------------------------------------------------------
def _make_a1_kernel(half_scale):
    """Fast path, a == 1:  gammainc(1, z) = 1 - exp(-z),  z = scale*sigmoid(x)."""
    half_scale = float(half_scale)

    def kernel(x_ref, o_ref):
        x = x_ref[...].astype(jnp.float32)
        # scale * sigmoid(x) == half_scale * tanh(x/2) + half_scale  (1 EUP tanh)
        z = half_scale * jnp.tanh(0.5 * x) + half_scale
        o_ref[...] = (1.0 - jnp.exp(-z)).astype(o_ref.dtype)

    return kernel


def _make_series_kernel(a, half_scale, coefs):
    """General path: Horner series for the regularized lower incomplete gamma."""
    a = float(a)
    half_scale = float(half_scale)
    coefs = [float(c) for c in coefs]  # d_n = 1/Gamma(a+n+1), n = 0..N-1

    def kernel(x_ref, o_ref):
        x = x_ref[...].astype(jnp.float32)
        z = half_scale * jnp.tanh(0.5 * x) + half_scale

        # Horner: S = sum_n d_n z^n   (1 vmul + 1 vadd per term)
        s = coefs[-1]
        for c in reversed(coefs[:-1]):
            s = s * z + c

        # P(a, z) = exp(a*log z - z) * S   (1/Gamma(a) already folded into d_n)
        # z == 0 gives log(z) = -inf -> exp(-inf) = 0, the correct limit.
        p = jnp.exp(a * jnp.log(z) - z) * s
        o_ref[...] = p.astype(o_ref.dtype)

    return kernel


# ---------------------------------------------------------------------------
# Wrapper
# ---------------------------------------------------------------------------
def _num_series_terms(scale):
    # truncation error for z <= scale; generous margin for f32 (28 for scale=4.5)
    return max(20, int(math.ceil(2.2 * float(scale) + 18.0)))


def gammainc_activation(x, a=1.0, scale_factor=4.5):
    """y = gammainc(a, scale_factor * sigmoid(x)); same shape/dtype as x."""
    a = float(a)
    scale = float(scale_factor)
    if a <= 0.0:
        raise ValueError("gammainc_activation requires a > 0")

    orig_shape = x.shape
    total = x.size
    if total == 0:
        return x

    # Flatten to a lane-dense 2D slab (rows, 128); pad so blocks divide evenly.
    rows = _round_up(pl.cdiv(total, _LANE), 8)
    block_rows = _choose_block_rows(rows)
    rows = _round_up(rows, block_rows)
    padded = rows * _LANE

    xf = x.reshape(-1)
    if padded != total:
        xf = jnp.pad(xf, (0, padded - total))
    x2 = xf.reshape(rows, _LANE)

    grid = (rows // block_rows,)
    data_spec = pl.BlockSpec((block_rows, _LANE), lambda i: (i, 0))
    cparams = pltpu.CompilerParams(
        dimension_semantics=("parallel",),          # v7x: shard across both TCs
        vmem_limit_bytes=32 * 1024 * 1024,
    )
    n_elems = rows * _LANE
    half_scale = 0.5 * scale

    if a == 1.0:
        kernel = _make_a1_kernel(half_scale)
        cost = pl.CostEstimate(
            flops=6 * n_elems, transcendentals=2 * n_elems, bytes_accessed=8 * n_elems
        )
    else:
        n_terms = _num_series_terms(scale)
        # d_n = exp(-lgamma(a+n+1)) = 1/Gamma(a+n+1): absorbs the 1/a leading
        # factor and the 1/Gamma(a) prefactor.
        coefs = [math.exp(-math.lgamma(a + n + 1.0)) for n in range(n_terms)]
        kernel = _make_series_kernel(a, half_scale, coefs)
        cost = pl.CostEstimate(
            flops=(2 * n_terms + 8) * n_elems,
            transcendentals=3 * n_elems,
            bytes_accessed=8 * n_elems,
        )

    out2 = pl.pallas_call(
        kernel,
        out_shape=jax.ShapeDtypeStruct(x2.shape, x2.dtype),
        grid=grid,
        in_specs=[data_spec],
        out_specs=data_spec,
        compiler_params=cparams,
        cost_estimate=cost,
    )(x2)

    return out2.reshape(-1)[:total].reshape(orig_shape)


if __name__ == "__main__":
    key = jax.random.PRNGKey(0)
    x = jax.random.normal(key, (2, 4, 16, 16), dtype=jnp.float32)

    # Deterministic parameter init, matching reset_parameters():
    a_param = 1.0
    scale_param = 4.5

    # Fast (a == 1) path — the module's default parameters.
    y = jax.block_until_ready(gammainc_activation(x, a=a_param, scale_factor=scale_param))
    z_ref = scale_param * jax.nn.sigmoid(x)
    y_ref = jax.scipy.special.gammainc(jnp.float32(a_param), z_ref)
    assert y.shape == x.shape
    assert jnp.allclose(y, y_ref, atol=2e-5, rtol=2e-5)

    # General (series) path — a != 1 exercises the Horner kernel.
    a2 = 1.7
    y2 = jax.block_until_ready(gammainc_activation(x, a=a2, scale_factor=scale_param))
    y2_ref = jax.scipy.special.gammainc(jnp.float32(a2), z_ref)
    assert jnp.allclose(y2, y2_ref, atol=2e-5, rtol=2e-5)

    print("KERNEL_OK")
</pallas_src>

<mosaic_0001>
module attributes {stable_mosaic.version = 11 : i64} {
  func.func @kernel(%arg0: i32, %arg1: memref<16x128xf32, #tpu.memory_space<vmem>>, %arg2: memref<16x128xf32, #tpu.memory_space<vmem>>) attributes {dimension_semantics = [#tpu.dimension_semantics<parallel>], iteration_bounds = array<i64: 1>, scalar_prefetch = 0 : i64, scratch_operands = 0 : i64, tpu.core_type = #tpu.core_type<tc>, window_params = [{transform_indices = @transform_0, window_bounds = array<i64: 16, 128>}, {transform_indices = @transform_1, window_bounds = array<i64: 16, 128>}]} {
    %c0 = arith.constant 0 : index
    %c0_0 = arith.constant 0 : index
    %0 = vector.load %arg1[%c0, %c0_0] : memref<16x128xf32, #tpu.memory_space<vmem>>, vector<16x128xf32>
    %cst = arith.constant 5.000000e-01 : f32
    %1 = vector.broadcast %cst : f32 to vector<16x128xf32>
    %2 = arith.mulf %1, %0 : vector<16x128xf32>
    %3 = math.tanh %2 : vector<16x128xf32>
    %cst_1 = arith.constant 2.250000e+00 : f32
    %4 = vector.broadcast %cst_1 : f32 to vector<16x128xf32>
    %5 = arith.mulf %4, %3 : vector<16x128xf32>
    %cst_2 = arith.constant 2.250000e+00 : f32
    %6 = vector.broadcast %cst_2 : f32 to vector<16x128xf32>
    %7 = arith.addf %5, %6 : vector<16x128xf32>
    %cst_3 = arith.constant 0.000000e+00 : f32
    %8 = vector.broadcast %cst_3 : f32 to vector<16x128xf32>
    %9 = arith.subf %8, %7 : vector<16x128xf32>
    %10 = math.exp %9 : vector<16x128xf32>
    %cst_4 = arith.constant 1.000000e+00 : f32
    %11 = vector.broadcast %cst_4 : f32 to vector<16x128xf32>
    %12 = arith.subf %11, %10 : vector<16x128xf32>
    %c0_5 = arith.constant 0 : index
    %c0_6 = arith.constant 0 : index
    %13 = vector.load %arg2[%c0_5, %c0_6] : memref<16x128xf32, #tpu.memory_space<vmem>>, vector<16x128xf32>
    tpu.vector_store %arg2[%c0_5, %c0_6], %12 {strides = array<i32>} : memref<16x128xf32, #tpu.memory_space<vmem>>, vector<16x128xf32>,
    return
  }
  func.func @transform_0(%arg0: i32) -> (i32, i32) {
    %c0_i32 = arith.constant 0 : i32
    %c0_i32_0 = arith.constant 0 : i32
    return %arg0, %c0_i32 : i32, i32
  }
  func.func @transform_1(%arg0: i32) -> (i32, i32) {
    %c0_i32 = arith.constant 0 : i32
    %c0_i32_0 = arith.constant 0 : i32
    return %arg0, %c0_i32 : i32, i32
  }
}

</mosaic_0001>

<llo_original>
// kernel: tpu_custom_call.1
$region0: #{tpu_custom_call.1}
  #allocation0 [shape = 'u32[]', space=smem, size = 0x4, offset = 0x4, fixed_abs, tag = 'smem constant byte address 0x4 - core index']
  #allocation1 [shape = 'u32[144,128]{1,0:T(1,128)}', space=vmem, size = 0x12000, scoped, tag = 'internal scratch']
  %s0 = inlined_call_operand.hbm [shape: f32[16,128], index: 0, kind: input, shape index: {}]
  %s1 = inlined_call_operand.hbm [shape: f32[16,128], index: 1, kind: output, shape index: {}]
  %s2 = sld [smem:[#allocation0]]
  $region18: #{tpu_custom_call.1} parent=0
    _
  %s4 = ssub.s32 1, %s2
  %s5 = scalar_select 0, %s4, %s2
  $region1: #{tpu_custom_call.1} parent=0
    #allocation2 [shape = 'u8[8192]{0}', space=vmem, size = 0x2000, scoped, tag = 'input window, operand 0, single buffered']
    #allocation3 [shape = 's32[1]{0}', space=sflag, size = 0x4, scoped, tag = 'scoped memory for tpu_custom_call.1']
    #allocation4 [shape = 's32[1]{0}', space=sflag, size = 0x4, scoped, tag = 'scoped memory for tpu_custom_call.1']
    #allocation5 [shape = 'u8[8192]{0}', space=vmem, size = 0x2000, scoped, tag = 'output window, operand 0, single buffered']
    %6 = vsyncpa [#allocation3], 0
    %7 = vsyncpa [#allocation4], 0
    // Predicated region
    $region2: #{tpu_custom_call.1} parent=1 // pred_check
      _
    $region3: #{tpu_custom_call.1} parent=1 // pred_check_branch
      %9 = sbr.rel (0) target = $region5
    $region4: #{tpu_custom_call.1} parent=1 // pred_region
      %s11 = ssub.s32 256, 256
      %12 = vsyncadd [#allocation3], %s11
      %s13 = sshll.u32 [#allocation2], 4
      %s14 = int_to_ptr.vmem [resolvable:$true] %s13
      %19 = dma.hbm_to_vmem [thread:$0]  %s0, 256, %s14, [#allocation3], 128, 128, 8
    $region5: #{tpu_custom_call.1} parent=1 // pred_fallthru
      _
    // Predicated region
    $region6: #{tpu_custom_call.1} parent=1 // pred_check
      _
    $region7: #{tpu_custom_call.1} parent=1 // pred_check_branch
      %21 = sbr.rel (0) target = $region9
    $region8: #{tpu_custom_call.1} parent=1 // pred_region
      %22 = dma.done [#allocation3], 256
    $region9: #{tpu_custom_call.1} parent=1 // pred_fallthru
      _
    %v23 = vld [vmem:[#allocation2] sm:$0xff]
    %v24 = vld [vmem:[#allocation2 + $0x8] sm:$0xff]
    %v25 = vmul.f32 %v23, 0.5
    %v26 = vmul.f32 %v24, 0.5
    %v27 = vtanh.pop %v25
    %v28 = vtanh.pop %v26
    %v29 = vmul.f32 %v27, 2.25
    %v30 = vmul.f32 %v28, 2.25
    %v31 = vadd.f32 %v29, 2.25
    %v32 = vadd.f32 %v30, 2.25
    %v33 = vsub.f32 0.0, %v31
    %v34 = vsub.f32 0.0, %v32
    %v35 = vmul.f32 %v33, 1.442695
    %v36 = vpow.pop %v35
    %v37 = vmul.f32 %v34, 1.442695
    %v38 = vpow.pop %v37
    %v39 = vsub.f32 1.0, %v36
    %v40 = vsub.f32 1.0, %v38
    %41 = vst [vmem:[#allocation5] sm:$0xff] %v39
    %42 = vst [vmem:[#allocation5 + $0x8] sm:$0xff] %v40
    // Predicated region
    $region10: #{tpu_custom_call.1} parent=1 // pred_check
      _
    $region11: #{tpu_custom_call.1} parent=1 // pred_check_branch
      %44 = sbr.rel (0) target = $region13
    $region12: #{tpu_custom_call.1} parent=1 // pred_region
      %s46 = ssub.s32 256, 256
      %47 = vsyncadd [#allocation4], %s46
      %s48 = sshll.u32 [#allocation5], 4
      %s49 = int_to_ptr.vmem [resolvable:$true] %s48
      %54 = dma.vmem_to_hbm [thread:$0]  %s49, 256, %s1, [#allocation4], 128, 128, 8
    $region13: #{tpu_custom_call.1} parent=1 // pred_fallthru
      _
    // Predicated region
    $region14: #{tpu_custom_call.1} parent=1 // pred_check
      _
    $region15: #{tpu_custom_call.1} parent=1 // pred_check_branch
      %56 = sbr.rel (0) target = $region17
    $region16: #{tpu_custom_call.1} parent=1 // pred_region
      %57 = dma.done [#allocation4], 256
    $region17: #{tpu_custom_call.1} parent=1 // pred_fallthru
      _
    %58 = vsyncpa [#allocation3], 1
    %59 = vsyncpa [#allocation4], 1

</llo_original>
